<compile_context>
chip_gen: v5e
topology: v5e:2x2
jax: 0.10.0
libtpu: 0.0.40
codegen_flags: <defaults>
</compile_context>

<pallas_src>
import functools

import jax
import jax.numpy as jnp
import numpy as np
from jax.experimental import pallas as pl
from jax.experimental.pallas import tpu as pltpu


def _max_token_kernel(x_ref, vals_ref, idx_ref, *, s_total):
    """One grid step: fold one (tb, ts, th) tile into the running (max, argmax)."""
    s = pl.program_id(2)
    tb, ts, th = x_ref.shape

    # Output blocks are revisited across the S axis -> use them as accumulators.
    @pl.when(s == 0)
    def _init():
        vals_ref[...] = jnp.full((tb, th), -jnp.inf, vals_ref.dtype)
        idx_ref[...] = jnp.zeros((tb, th), jnp.int32)

    x = x_ref[...]                                                    # (tb, ts, th)

    # Global token index for this S tile as a (1, ts, 1) column; it broadcasts
    # for free in lanes / leading dim (no full (ts, th) iota materialized).
    token_ids = jax.lax.broadcasted_iota(jnp.int32, (1, ts, 1), 1) + s * ts

    # Mask BlockSpec padding in the last S tile (static no-op when S % ts == 0).
    if s_total % ts != 0:
        x = jnp.where(token_ids < s_total, x, jnp.array(-jnp.inf, x.dtype))

    big = jnp.int32(s_total)                                          # > any valid index
    is_nan = jnp.isnan(x)
    has_nan = jnp.any(is_nan, axis=1, keepdims=True)                  # (tb, 1, th)

    blk_max = jnp.max(x, axis=1, keepdims=True)                       # (tb, 1, th)
    blk_idx = jnp.min(jnp.where(x == blk_max, token_ids, big), axis=1)  # (tb, th)

    # torch.max semantics: NaN is the max, and the first NaN's index is returned.
    nan_idx = jnp.min(jnp.where(is_nan, token_ids, big), axis=1)      # (tb, th)
    blk_max = jnp.where(has_nan, jnp.array(jnp.nan, x.dtype), blk_max)
    blk_idx = jnp.where(has_nan[:, 0, :], nan_idx, blk_idx)
    blk_max = blk_max[:, 0, :].astype(vals_ref.dtype)                 # (tb, th)

    run_max = vals_ref[...]
    run_idx = idx_ref[...]
    # Strictly-greater keeps the earliest index on ties across S tiles; the NaN
    # clause lets a new NaN beat any finite running max (but not an earlier NaN).
    better = (blk_max > run_max) | (jnp.isnan(blk_max) & ~jnp.isnan(run_max))
    vals_ref[...] = jnp.where(better, blk_max, run_max)
    idx_ref[...] = jnp.where(better, blk_idx, run_idx)


def _pick_tiles(B, S, H, itemsize, vmem_budget_bytes=4 * 1024 * 1024):
    """Tile sizes keeping each double-buffered input block well inside VMEM.

    ~4 MiB per input buffer (8 MiB pipelined) fits the 32 MiB scoped default on
    every generation and leaves headroom on v7x's 64 MiB physical VMEM, while
    keeping per-step bytes large enough to amortize grid-step overhead on the
    128 MiB / lower-bandwidth v5e/v6e parts.
    """
    tb = B if B <= 8 else 8                      # sublane-dense output rows
    th = H if H <= 512 else 512                  # multiple of 128 when H is tiled
    max_ts = max(8, vmem_budget_bytes // (tb * th * itemsize))
    ts = S if S <= max_ts else (max_ts // 8) * 8  # multiple of 8 when S is tiled
    return tb, ts, th


def max_token(x, dim_idx=1, n_tokens=None, *, tile_b=None, tile_s=None, tile_h=None):
    """Pallas implementation of MaxToken(dim_idx).forward(x, n_tokens)."""
    assert x.ndim == 3 and dim_idx == 1, "implemented for (B, S, H) with dim_idx=1"
    assert jnp.issubdtype(x.dtype, jnp.floating), "floating-point input expected"
    del n_tokens  # unused by the reference module
    B, S, H = x.shape
    itemsize = jnp.dtype(x.dtype).itemsize

    d_tb, d_ts, d_th = _pick_tiles(B, S, H, itemsize)
    tb = tile_b or d_tb
    ts = tile_s or d_ts
    th = tile_h or d_th

    grid = (pl.cdiv(B, tb), pl.cdiv(H, th), pl.cdiv(S, ts))

    cost = pl.CostEstimate(
        flops=2 * B * S * H,
        transcendentals=0,
        bytes_accessed=B * S * H * itemsize + B * H * (itemsize + 4),
    )

    kernel = functools.partial(_max_token_kernel, s_total=S)

    vals, idx = pl.pallas_call(
        kernel,
        out_shape=(
            jax.ShapeDtypeStruct((B, H), x.dtype),
            jax.ShapeDtypeStruct((B, H), jnp.int32),
        ),
        grid=grid,
        in_specs=[pl.BlockSpec((tb, ts, th), lambda b, h, s: (b, s, h))],
        out_specs=(
            pl.BlockSpec((tb, th), lambda b, h, s: (b, h)),
            pl.BlockSpec((tb, th), lambda b, h, s: (b, h)),
        ),
        compiler_params=pltpu.CompilerParams(
            dimension_semantics=("parallel", "parallel", "arbitrary"),
        ),
        cost_estimate=cost,
    )(x)
    return vals, idx


class MaxToken:
    """Thin mirror of the PyTorch module interface."""

    def __init__(self, dim_idx):
        self.dim_idx = dim_idx

    def __call__(self, x, n_tokens):
        return max_token(x, dim_idx=self.dim_idx, n_tokens=n_tokens)


if __name__ == "__main__":
    key = jax.random.PRNGKey(0)
    # Small but non-trivial: multiple tiles on every grid axis + a masked S tail.
    B, S, H = 3, 37, 256
    x = jax.random.normal(key, (B, S, H), dtype=jnp.float32)
    n_tokens = S  # unused, kept for interface parity

    # Default (auto-tiled) path.
    vals, idx = max_token(x, dim_idx=1, n_tokens=n_tokens)
    # Explicitly small tiles: exercises S-tail masking + output-resident accumulation.
    vals_t, idx_t = max_token(x, dim_idx=1, n_tokens=n_tokens, tile_s=16, tile_h=128)
    jax.block_until_ready((vals, idx, vals_t, idx_t))

    ref_vals = jnp.max(x, axis=1)
    ref_idx = jnp.argmax(x, axis=1).astype(jnp.int32)
    for v, i in ((vals, idx), (vals_t, idx_t)):
        np.testing.assert_allclose(np.asarray(v), np.asarray(ref_vals), rtol=1e-6)
        np.testing.assert_array_equal(np.asarray(i), np.asarray(ref_idx))

    # NaN behaviour matches torch.max: NaN is the max and its index is returned.
    x_nan = x.at[1, 5, 7].set(jnp.nan)
    v_n, i_n = max_token(x_nan, dim_idx=1, n_tokens=n_tokens, tile_s=16, tile_h=128)
    jax.block_until_ready((v_n, i_n))
    assert bool(jnp.isnan(v_n[1, 7])) and int(i_n[1, 7]) == 5

    print("KERNEL_OK")
</pallas_src>

<mosaic_0001>
module attributes {stable_mosaic.version = 11 : i64} {
  func.func @_max_token_kernel(%arg0: i32, %arg1: i32, %arg2: i32, %arg3: memref<3x37x256xf32, #tpu.memory_space<vmem>>, %arg4: memref<3x256xf32, #tpu.memory_space<vmem>>, %arg5: memref<3x256xi32, #tpu.memory_space<vmem>>) attributes {dimension_semantics = [#tpu.dimension_semantics<parallel>, #tpu.dimension_semantics<parallel>, #tpu.dimension_semantics<arbitrary>], iteration_bounds = array<i64: 1, 1, 1>, scalar_prefetch = 0 : i64, scratch_operands = 0 : i64, tpu.core_type = #tpu.core_type<tc>, window_params = [{transform_indices = @transform_0, window_bounds = array<i64: 3, 37, 256>}, {transform_indices = @transform_1, window_bounds = array<i64: 3, 256>}, {transform_indices = @transform_2, window_bounds = array<i64: 3, 256>}]} {
    %c0_i32 = arith.constant 0 : i32
    %0 = arith.cmpi eq, %arg2, %c0_i32 : i32
    %1 = arith.extui %0 : i1 to i32
    %c0_i32_0 = arith.constant 0 : i32
    %2 = arith.cmpi ne, %1, %c0_i32_0 : i32
    scf.if %2 {
      %cst_21 = arith.constant 0xFF800000 : f32
      %47 = vector.broadcast %cst_21 : f32 to vector<3x256xf32>
      %c0_22 = arith.constant 0 : index
      %c0_23 = arith.constant 0 : index
      %48 = vector.load %arg4[%c0_22, %c0_23] : memref<3x256xf32, #tpu.memory_space<vmem>>, vector<3x256xf32>
      tpu.vector_store %arg4[%c0_22, %c0_23], %47 {strides = array<i32>} : memref<3x256xf32, #tpu.memory_space<vmem>>, vector<3x256xf32>,
      %c0_i32_24 = arith.constant 0 : i32
      %49 = vector.broadcast %c0_i32_24 : i32 to vector<3x256xi32>
      %c0_25 = arith.constant 0 : index
      %c0_26 = arith.constant 0 : index
      %50 = vector.load %arg5[%c0_25, %c0_26] : memref<3x256xi32, #tpu.memory_space<vmem>>, vector<3x256xi32>
      tpu.vector_store %arg5[%c0_25, %c0_26], %49 {strides = array<i32>} : memref<3x256xi32, #tpu.memory_space<vmem>>, vector<3x256xi32>,
    } else {
    }
    %c0 = arith.constant 0 : index
    %c0_1 = arith.constant 0 : index
    %c0_2 = arith.constant 0 : index
    %3 = vector.load %arg3[%c0, %c0_1, %c0_2] : memref<3x37x256xf32, #tpu.memory_space<vmem>>, vector<3x37x256xf32>
    %4 = tpu.iota {dimensions = array<i32: 1>} : vector<1x37x1xi32>
    %c37_i32 = arith.constant 37 : i32
    %5 = arith.muli %arg2, %c37_i32 : i32
    %6 = vector.broadcast %5 : i32 to vector<1x37x1xi32>
    %7 = arith.addi %4, %6 : vector<1x37x1xi32>
    %8 = arith.cmpf one, %3, %3 : vector<3x37x256xf32>
    %cst = arith.constant 1.000000e+00 : f32
    %cst_3 = arith.constant 0.000000e+00 : f32
    %9 = vector.broadcast %cst : f32 to vector<3x37x256xf32>
    %10 = vector.broadcast %cst_3 : f32 to vector<3x37x256xf32>
    %11 = arith.select %8, %9, %10 : vector<3x37x256xi1>, vector<3x37x256xf32>
    %cst_4 = arith.constant dense<0xFF800000> : vector<3x256xf32>
    %12 = vector.multi_reduction <maximumf>, %11, %cst_4 [1] : vector<3x37x256xf32> to vector<3x256xf32>
    %cst_5 = arith.constant 0.000000e+00 : f32
    %13 = vector.broadcast %cst_5 : f32 to vector<3x256xf32>
    %14 = arith.cmpf ogt, %12, %13 : vector<3x256xf32>
    %15 = vector.shape_cast %14 : vector<3x256xi1> to vector<3x1x256xi1>
    %cst_6 = arith.constant dense<0xFF800000> : vector<3x256xf32>
    %16 = vector.multi_reduction <maximumf>, %3, %cst_6 [1] : vector<3x37x256xf32> to vector<3x256xf32>
    %17 = vector.shape_cast %16 : vector<3x256xf32> to vector<3x1x256xf32>
    %18 = vector.broadcast %17 : vector<3x1x256xf32> to vector<3x37x256xf32>
    %19 = arith.cmpf oeq, %3, %18 : vector<3x37x256xf32>
    %c37_i32_7 = arith.constant 37 : i32
    %20 = vector.shape_cast %7 : vector<1x37x1xi32> to vector<1x37x1xi32>
    %21 = vector.broadcast %20 : vector<1x37x1xi32> to vector<3x37x256xi32>
    %22 = vector.broadcast %c37_i32_7 : i32 to vector<3x37x256xi32>
    %23 = arith.select %19, %21, %22 : vector<3x37x256xi1>, vector<3x37x256xi32>
    %cst_8 = arith.constant dense<2147483647> : vector<3x256xi32>
    %24 = vector.multi_reduction <minsi>, %23, %cst_8 [1] : vector<3x37x256xi32> to vector<3x256xi32>
    %c37_i32_9 = arith.constant 37 : i32
    %25 = vector.shape_cast %7 : vector<1x37x1xi32> to vector<1x37x1xi32>
    %26 = vector.broadcast %25 : vector<1x37x1xi32> to vector<3x37x256xi32>
    %27 = vector.broadcast %c37_i32_9 : i32 to vector<3x37x256xi32>
    %28 = arith.select %8, %26, %27 : vector<3x37x256xi1>, vector<3x37x256xi32>
    %cst_10 = arith.constant dense<2147483647> : vector<3x256xi32>
    %29 = vector.multi_reduction <minsi>, %28, %cst_10 [1] : vector<3x37x256xi32> to vector<3x256xi32>
    %cst_11 = arith.constant 0x7FC00000 : f32
    %30 = vector.broadcast %cst_11 : f32 to vector<3x1x256xf32>
    %31 = arith.select %15, %30, %17 : vector<3x1x256xi1>, vector<3x1x256xf32>
    %32 = vector.shape_cast %15 : vector<3x1x256xi1> to vector<3x256xi1>
    %33 = arith.select %32, %29, %24 : vector<3x256xi1>, vector<3x256xi32>
    %34 = vector.shape_cast %31 : vector<3x1x256xf32> to vector<3x256xf32>
    %c0_12 = arith.constant 0 : index
    %c0_13 = arith.constant 0 : index
    %35 = vector.load %arg4[%c0_12, %c0_13] : memref<3x256xf32, #tpu.memory_space<vmem>>, vector<3x256xf32>
    %c0_14 = arith.constant 0 : index
    %c0_15 = arith.constant 0 : index
    %36 = vector.load %arg5[%c0_14, %c0_15] : memref<3x256xi32, #tpu.memory_space<vmem>>, vector<3x256xi32>
    %37 = arith.cmpf ogt, %34, %35 : vector<3x256xf32>
    %38 = arith.cmpf one, %34, %34 : vector<3x256xf32>
    %39 = arith.cmpf one, %35, %35 : vector<3x256xf32>
    %cst_16 = arith.constant dense<true> : vector<3x256xi1>
    %40 = arith.xori %39, %cst_16 : vector<3x256xi1>
    %41 = arith.andi %38, %40 : vector<3x256xi1>
    %42 = arith.ori %37, %41 : vector<3x256xi1>
    %43 = arith.select %42, %34, %35 : vector<3x256xi1>, vector<3x256xf32>
    %c0_17 = arith.constant 0 : index
    %c0_18 = arith.constant 0 : index
    %44 = vector.load %arg4[%c0_17, %c0_18] : memref<3x256xf32, #tpu.memory_space<vmem>>, vector<3x256xf32>
    tpu.vector_store %arg4[%c0_17, %c0_18], %43 {strides = array<i32>} : memref<3x256xf32, #tpu.memory_space<vmem>>, vector<3x256xf32>,
    %45 = arith.select %42, %33, %36 : vector<3x256xi1>, vector<3x256xi32>
    %c0_19 = arith.constant 0 : index
    %c0_20 = arith.constant 0 : index
    %46 = vector.load %arg5[%c0_19, %c0_20] : memref<3x256xi32, #tpu.memory_space<vmem>>, vector<3x256xi32>
    tpu.vector_store %arg5[%c0_19, %c0_20], %45 {strides = array<i32>} : memref<3x256xi32, #tpu.memory_space<vmem>>, vector<3x256xi32>,
    return
  }
  func.func @transform_0(%arg0: i32, %arg1: i32, %arg2: i32) -> (i32, i32, i32) {
    %c0_i32 = arith.constant 0 : i32
    return %arg0, %arg2, %arg1 : i32, i32, i32
  }
  func.func @transform_1(%arg0: i32, %arg1: i32, %arg2: i32) -> (i32, i32) {
    %c0_i32 = arith.constant 0 : i32
    return %arg0, %arg1 : i32, i32
  }
  func.func @transform_2(%arg0: i32, %arg1: i32, %arg2: i32) -> (i32, i32) {
    %c0_i32 = arith.constant 0 : i32
    return %arg0, %arg1 : i32, i32
  }
}

</mosaic_0001>

<llo_original>
// kernel: tpu_custom_call.1
$region0: #{tpu_custom_call.1}
  #allocation0 [shape = 'u32[]', space=smem, size = 0x4, offset = 0x4, fixed_abs, tag = 'smem constant byte address 0x4 - core index']
  #allocation1 [shape = 'u32[72,128]{1,0:T(1,128)}', space=vmem, size = 0x9000, scoped, tag = 'internal scratch']
  %s0 = inlined_call_operand.hbm [shape: f32[3,37,256], index: 0, kind: input, shape index: {}]
  %s1 = inlined_call_operand.hbm [shape: f32[3,256], index: 1, kind: output, shape index: {0}]
  %s2 = inlined_call_operand.hbm [shape: s32[3,256], index: 2, kind: output, shape index: {1}]
  %3 = xla_tuple %s1, %s2
  %s4 = sld [smem:[#allocation0]]
  $region30: #{tpu_custom_call.1} parent=0
    _
  %s6 = ssub.s32 1, %s4
  %s7 = scalar_select 0, %s6, %s4
  $region1: #{tpu_custom_call.1} parent=0
    #allocation2 [shape = 'u8[122880]{0}', space=vmem, size = 0x1e000, scoped, tag = 'input window, operand 0, single buffered']
    #allocation3 [shape = 's32[1]{0}', space=sflag, size = 0x4, scoped, tag = 'scoped memory for tpu_custom_call.1']
    #allocation4 [shape = 's32[1]{0}', space=sflag, size = 0x4, scoped, tag = 'scoped memory for tpu_custom_call.1']
    #allocation5 [shape = 'u8[4096]{0}', space=vmem, size = 0x1000, scoped, tag = 'output window, operand 0, single buffered']
    #allocation6 [shape = 'u8[4096]{0}', space=vmem, size = 0x1000, scoped, tag = 'output window, operand 1, single buffered']
    #allocation7 [shape = 's32[1]{0}', space=sflag, size = 0x4, scoped, tag = 'scoped memory for tpu_custom_call.1']
    %8 = vsyncpa [#allocation3], 0
    %9 = vsyncpa [#allocation4], 0
    %10 = vsyncpa [#allocation7], 0
    // Predicated region
    $region2: #{tpu_custom_call.1} parent=1 // pred_check
      _
    $region3: #{tpu_custom_call.1} parent=1 // pred_check_branch
      %12 = sbr.rel (0) target = $region5
    $region4: #{tpu_custom_call.1} parent=1 // pred_region
      %14 = vsyncadd [#allocation3], 0
      %s15 = sshll.u32 %s0, 4
      %s16 = int_to_ptr.hbm [resolvable:$true] %s15
      %s17 = sshll.u32 [#allocation2], 4
      %s18 = int_to_ptr.vmem [resolvable:$true] %s17
      %23 = dma.hbm_to_vmem [thread:$0]  %s16, 3840, %s18, [#allocation3], 256, 256, 16
    $region5: #{tpu_custom_call.1} parent=1 // pred_fallthru
      _
    // Predicated region
    $region6: #{tpu_custom_call.1} parent=1 // pred_check
      _
    $region7: #{tpu_custom_call.1} parent=1 // pred_check_branch
      %25 = sbr.rel (0) target = $region9
    $region8: #{tpu_custom_call.1} parent=1 // pred_region
      %27 = dma.done [#allocation3], 3840
    $region9: #{tpu_custom_call.1} parent=1 // pred_fallthru
      _
    %p28 = scmp.eq.s32.totalorder 0, 0
    // Predicated region
    $region10: #{tpu_custom_call.1} parent=1 // pred_check
      %p29 = pneg %p28
    $region11: #{tpu_custom_call.1} parent=1 // pred_check_branch
      %31 = sbr.rel (%p29) target = $region13
    $region12: #{tpu_custom_call.1} parent=1 // pred_region
      %32 = vst [vmem:[#allocation5] sm:$0x77] -inf
      %33 = vst [vmem:[#allocation6] sm:$0x77] 0
    $region13: #{tpu_custom_call.1} parent=1 // pred_fallthru
      _
    %v34 = vld [vmem:[#allocation2] sm:$0xff]
    %v35 = vld [vmem:[#allocation2 + $0x8] sm:$0xff]
    %v36 = vld [vmem:[#allocation2 + $0x10] sm:$0xff]
    %v37 = vld [vmem:[#allocation2 + $0x18] sm:$0xff]
    %v38 = vld [vmem:[#allocation2 + $0x20] sm:$0xff]
    %v39 = vld [vmem:[#allocation2 + $0x28] sm:$0xff]
    %v40 = vld [vmem:[#allocation2 + $0x30] sm:$0xff]
    %v41 = vld [vmem:[#allocation2 + $0x38] sm:$0xff]
    %v42 = vld [vmem:[#allocation2 + $0x40] sm:$0x1f]
    %v43 = vld [vmem:[#allocation2 + $0x48] sm:$0x1f]
    %v44 = vld [vmem:[#allocation2 + $0x50] sm:$0xff]
    %v45 = vld [vmem:[#allocation2 + $0x58] sm:$0xff]
    %v46 = vld [vmem:[#allocation2 + $0x60] sm:$0xff]
    %v47 = vld [vmem:[#allocation2 + $0x68] sm:$0xff]
    %v48 = vld [vmem:[#allocation2 + $0x70] sm:$0xff]
    %v49 = vld [vmem:[#allocation2 + $0x78] sm:$0xff]
    %v50 = vld [vmem:[#allocation2 + $0x80] sm:$0xff]
    %v51 = vld [vmem:[#allocation2 + $0x88] sm:$0xff]
    %v52 = vld [vmem:[#allocation2 + $0x90] sm:$0x1f]
    %v53 = vld [vmem:[#allocation2 + $0x98] sm:$0x1f]
    %v54 = vld [vmem:[#allocation2 + $0xa0] sm:$0xff]
    %v55 = vld [vmem:[#allocation2 + $0xa8] sm:$0xff]
    %v56 = vld [vmem:[#allocation2 + $0xb0] sm:$0xff]
    %v57 = vld [vmem:[#allocation2 + $0xb8] sm:$0xff]
    %v58 = vld [vmem:[#allocation2 + $0xc0] sm:$0xff]
    %v59 = vld [vmem:[#allocation2 + $0xc8] sm:$0xff]
    %v60 = vld [vmem:[#allocation2 + $0xd0] sm:$0xff]
    %v61 = vld [vmem:[#allocation2 + $0xd8] sm:$0xff]
    %v62 = vld [vmem:[#allocation2 + $0xe0] sm:$0x1f]
    %v63 = vld [vmem:[#allocation2 + $0xe8] sm:$0x1f]
    %v64 = vlaneseq
    %v65 = vshrl.u32 %v64, 7
    %v66 = vadd.s32 %v65, 8
    %v67 = vadd.s32 %v65, 16
    %v68 = vadd.s32 %v65, 24
    %v69 = vadd.s32 %v65, 32
    %s70 = smul.u32 0, 37
    %v71 = vstv %s70
    %v72 = vadd.s32 %v65, %v71
    %v73 = vadd.s32 %v66, %v71
    %v74 = vadd.s32 %v67, %v71
    %v75 = vadd.s32 %v68, %v71
    %v76 = vadd.s32 %v69, %v71
    %vm77 = vcmp.ne.f32.partialorder %v34, %v34
    %vm78 = vcmp.ne.f32.partialorder %v35, %v35
    %vm79 = vcmp.ne.f32.partialorder %v36, %v36
    %vm80 = vcmp.ne.f32.partialorder %v37, %v37
    %vm81 = vcmp.ne.f32.partialorder %v38, %v38
    %vm82 = vcmp.ne.f32.partialorder %v39, %v39
    %vm83 = vcmp.ne.f32.partialorder %v40, %v40
    %vm84 = vcmp.ne.f32.partialorder %v41, %v41
    %vm85 = vcmp.ne.f32.partialorder %v42, %v42
    %vm86 = vcmp.ne.f32.partialorder %v43, %v43
    %vm87 = vcmp.ne.f32.partialorder %v44, %v44
    %vm88 = vcmp.ne.f32.partialorder %v45, %v45
    %vm89 = vcmp.ne.f32.partialorder %v46, %v46
    %vm90 = vcmp.ne.f32.partialorder %v47, %v47
    %vm91 = vcmp.ne.f32.partialorder %v48, %v48
    %vm92 = vcmp.ne.f32.partialorder %v49, %v49
    %vm93 = vcmp.ne.f32.partialorder %v50, %v50
    %vm94 = vcmp.ne.f32.partialorder %v51, %v51
    %vm95 = vcmp.ne.f32.partialorder %v52, %v52
    %vm96 = vcmp.ne.f32.partialorder %v53, %v53
    %vm97 = vcmp.ne.f32.partialorder %v54, %v54
    %vm98 = vcmp.ne.f32.partialorder %v55, %v55
    %vm99 = vcmp.ne.f32.partialorder %v56, %v56
    %vm100 = vcmp.ne.f32.partialorder %v57, %v57
    %vm101 = vcmp.ne.f32.partialorder %v58, %v58
    %vm102 = vcmp.ne.f32.partialorder %v59, %v59
    %vm103 = vcmp.ne.f32.partialorder %v60, %v60
    %vm104 = vcmp.ne.f32.partialorder %v61, %v61
    %vm105 = vcmp.ne.f32.partialorder %v62, %v62
    %vm106 = vcmp.ne.f32.partialorder %v63, %v63
    %v107 = vsel %vm77, 1.0, 0.0
    %v108 = vsel %vm78, 1.0, 0.0
    %v109 = vsel %vm79, 1.0, 0.0
    %v110 = vsel %vm80, 1.0, 0.0
    %v111 = vsel %vm81, 1.0, 0.0
    %v112 = vsel %vm82, 1.0, 0.0
    %v113 = vsel %vm83, 1.0, 0.0
    %v114 = vsel %vm84, 1.0, 0.0
    %v115 = vsel %vm85, 1.0, 0.0
    %v116 = vsel %vm86, 1.0, 0.0
    %v117 = vsel %vm87, 1.0, 0.0
    %v118 = vsel %vm88, 1.0, 0.0
    %v119 = vsel %vm89, 1.0, 0.0
    %v120 = vsel %vm90, 1.0, 0.0
    %v121 = vsel %vm91, 1.0, 0.0
    %v122 = vsel %vm92, 1.0, 0.0
    %v123 = vsel %vm93, 1.0, 0.0
    %v124 = vsel %vm94, 1.0, 0.0
    %v125 = vsel %vm95, 1.0, 0.0
    %v126 = vsel %vm96, 1.0, 0.0
    %v127 = vsel %vm97, 1.0, 0.0
    %v128 = vsel %vm98, 1.0, 0.0
    %v129 = vsel %vm99, 1.0, 0.0
    %v130 = vsel %vm100, 1.0, 0.0
    %v131 = vsel %vm101, 1.0, 0.0
    %v132 = vsel %vm102, 1.0, 0.0
    %v133 = vsel %vm103, 1.0, 0.0
    %v134 = vsel %vm104, 1.0, 0.0
    %v135 = vsel %vm105, 1.0, 0.0
    %v136 = vsel %vm106, 1.0, 0.0
    %v137 = vmax.f32 %v107, %v109
    %v138 = vmax.f32 %v137, %v111
    %v139 = vmax.f32 %v138, %v113
    %vm140 = vcmask 1044480
    %v141 = vsel %vm140, %v115, -inf
    %v142 = vmax.f32 %v139, %v141
    %v143 = vrot.slane %v142, 4
    %v144 = vmax.f32 %v142, %v143
    %v145 = vrot.slane %v144, 2
    %v146 = vmax.f32 %v144, %v145
    %v147 = vrot.slane %v146, 1
    %v148 = vmax.f32 %v146, %v147
    %v149 = vmax.f32 %v108, %v110
    %v150 = vmax.f32 %v149, %v112
    %v151 = vmax.f32 %v150, %v114
    %v152 = vsel %vm140, %v116, -inf
    %v153 = vmax.f32 %v151, %v152
    %v154 = vrot.slane %v153, 4
    %v155 = vmax.f32 %v153, %v154
    %v156 = vrot.slane %v155, 2
    %v157 = vmax.f32 %v155, %v156
    %v158 = vrot.slane %v157, 1
    %v159 = vmax.f32 %v157, %v158
    %v160 = vmax.f32 %v117, %v119
    %v161 = vmax.f32 %v160, %v121
    %v162 = vmax.f32 %v161, %v123
    %v163 = vsel %vm140, %v125, -inf
    %v164 = vmax.f32 %v162, %v163
    %v165 = vrot.slane %v164, 4
    %v166 = vmax.f32 %v164, %v165
    %v167 = vrot.slane %v166, 2
    %v168 = vmax.f32 %v166, %v167
    %v169 = vrot.slane %v168, 1
    %v170 = vmax.f32 %v168, %v169
    %v171 = vmax.f32 %v118, %v120
    %v172 = vmax.f32 %v171, %v122
    %v173 = vmax.f32 %v172, %v124
    %v174 = vsel %vm140, %v126, -inf
    %v175 = vmax.f32 %v173, %v174
    %v176 = vrot.slane %v175, 4
    %v177 = vmax.f32 %v175, %v176
    %v178 = vrot.slane %v177, 2
    %v179 = vmax.f32 %v177, %v178
    %v180 = vrot.slane %v179, 1
    %v181 = vmax.f32 %v179, %v180
    %v182 = vmax.f32 %v127, %v129
    %v183 = vmax.f32 %v182, %v131
    %v184 = vmax.f32 %v183, %v133
    %v185 = vsel %vm140, %v135, -inf
    %v186 = vmax.f32 %v184, %v185
    %v187 = vrot.slane %v186, 4
    %v188 = vmax.f32 %v186, %v187
    %v189 = vrot.slane %v188, 2
    %v190 = vmax.f32 %v188, %v189
    %v191 = vrot.slane %v190, 1
    %v192 = vmax.f32 %v190, %v191
    %v193 = vmax.f32 %v128, %v130
    %v194 = vmax.f32 %v193, %v132
    %v195 = vmax.f32 %v194, %v134
    %v196 = vsel %vm140, %v136, -inf
    %v197 = vmax.f32 %v195, %v196
    %v198 = vrot.slane %v197, 4
    %v199 = vmax.f32 %v197, %v198
    %v200 = vrot.slane %v199, 2
    %v201 = vmax.f32 %v199, %v200
    %v202 = vrot.slane %v201, 1
    %v203 = vmax.f32 %v201, %v202
    %vm204 = vcmp.gt.f32.partialorder %v148, 0.0
    %vm205 = vcmp.gt.f32.partialorder %v159, 0.0
    %vm206 = vcmp.gt.f32.partialorder %v170, 0.0
    %vm207 = vcmp.gt.f32.partialorder %v181, 0.0
    %vm208 = vcmp.gt.f32.partialorder %v192, 0.0
    %vm209 = vcmp.gt.f32.partialorder %v203, 0.0
    %v210 = vmax.f32 %v34, %v36
    %v211 = vmax.f32 %v210, %v38
    %v212 = vmax.f32 %v211, %v40
    %v213 = vsel %vm140, %v42, -inf
    %v214 = vmax.f32 %v212, %v213
    %v215 = vrot.slane %v214, 4
    %v216 = vmax.f32 %v214, %v215
    %v217 = vrot.slane %v216, 2
    %v218 = vmax.f32 %v216, %v217
    %v219 = vrot.slane %v218, 1
    %v220 = vmax.f32 %v218, %v219
    %v221 = vmax.f32 %v35, %v37
    %v222 = vmax.f32 %v221, %v39
    %v223 = vmax.f32 %v222, %v41
    %v224 = vsel %vm140, %v43, -inf
    %v225 = vmax.f32 %v223, %v224
    %v226 = vrot.slane %v225, 4
    %v227 = vmax.f32 %v225, %v226
    %v228 = vrot.slane %v227, 2
    %v229 = vmax.f32 %v227, %v228
    %v230 = vrot.slane %v229, 1
    %v231 = vmax.f32 %v229, %v230
    %v232 = vmax.f32 %v44, %v46
    %v233 = vmax.f32 %v232, %v48
    %v234 = vmax.f32 %v233, %v50
    %v235 = vsel %vm140, %v52, -inf
    %v236 = vmax.f32 %v234, %v235
    %v237 = vrot.slane %v236, 4
    %v238 = vmax.f32 %v236, %v237
    %v239 = vrot.slane %v238, 2
    %v240 = vmax.f32 %v238, %v239
    %v241 = vrot.slane %v240, 1
    %v242 = vmax.f32 %v240, %v241
    %v243 = vmax.f32 %v45, %v47
    %v244 = vmax.f32 %v243, %v49
    %v245 = vmax.f32 %v244, %v51
    %v246 = vsel %vm140, %v53, -inf
    %v247 = vmax.f32 %v245, %v246
    %v248 = vrot.slane %v247, 4
    %v249 = vmax.f32 %v247, %v248
    %v250 = vrot.slane %v249, 2
    %v251 = vmax.f32 %v249, %v250
    %v252 = vrot.slane %v251, 1
    %v253 = vmax.f32 %v251, %v252
    %v254 = vmax.f32 %v54, %v56
    %v255 = vmax.f32 %v254, %v58
    %v256 = vmax.f32 %v255, %v60
    %v257 = vsel %vm140, %v62, -inf
    %v258 = vmax.f32 %v256, %v257
    %v259 = vrot.slane %v258, 4
    %v260 = vmax.f32 %v258, %v259
    %v261 = vrot.slane %v260, 2
    %v262 = vmax.f32 %v260, %v261
    %v263 = vrot.slane %v262, 1
    %v264 = vmax.f32 %v262, %v263
    %v265 = vmax.f32 %v55, %v57
    %v266 = vmax.f32 %v265, %v59
    %v267 = vmax.f32 %v266, %v61
    %v268 = vsel %vm140, %v63, -inf
    %v269 = vmax.f32 %v267, %v268
    %v270 = vrot.slane %v269, 4
    %v271 = vmax.f32 %v269, %v270
    %v272 = vrot.slane %v271, 2
    %v273 = vmax.f32 %v271, %v272
    %v274 = vrot.slane %v273, 1
    %v275 = vmax.f32 %v273, %v274
    %vm276 = vcmp.eq.f32.partialorder %v34, %v220
    %vm277 = vcmp.eq.f32.partialorder %v35, %v231
    %vm278 = vcmp.eq.f32.partialorder %v36, %v220
    %vm279 = vcmp.eq.f32.partialorder %v37, %v231
    %vm280 = vcmp.eq.f32.partialorder %v38, %v220
    %vm281 = vcmp.eq.f32.partialorder %v39, %v231
    %vm282 = vcmp.eq.f32.partialorder %v40, %v220
    %vm283 = vcmp.eq.f32.partialorder %v41, %v231
    %vm284 = vcmp.eq.f32.partialorder %v42, %v220
    %vm285 = vcmp.eq.f32.partialorder %v43, %v231
    %vm286 = vcmp.eq.f32.partialorder %v44, %v242
    %vm287 = vcmp.eq.f32.partialorder %v45, %v253
    %vm288 = vcmp.eq.f32.partialorder %v46, %v242
    %vm289 = vcmp.eq.f32.partialorder %v47, %v253
    %vm290 = vcmp.eq.f32.partialorder %v48, %v242
    %vm291 = vcmp.eq.f32.partialorder %v49, %v253
    %vm292 = vcmp.eq.f32.partialorder %v50, %v242
    %vm293 = vcmp.eq.f32.partialorder %v51, %v253
    %vm294 = vcmp.eq.f32.partialorder %v52, %v242
    %vm295 = vcmp.eq.f32.partialorder %v53, %v253
    %vm296 = vcmp.eq.f32.partialorder %v54, %v264
    %vm297 = vcmp.eq.f32.partialorder %v55, %v275
    %vm298 = vcmp.eq.f32.partialorder %v56, %v264
    %vm299 = vcmp.eq.f32.partialorder %v57, %v275
    %vm300 = vcmp.eq.f32.partialorder %v58, %v264
    %vm301 = vcmp.eq.f32.partialorder %v59, %v275
    %vm302 = vcmp.eq.f32.partialorder %v60, %v264
    %vm303 = vcmp.eq.f32.partialorder %v61, %v275
    %vm304 = vcmp.eq.f32.partialorder %v62, %v264
    %vm305 = vcmp.eq.f32.partialorder %v63, %v275
    %v306 = vsel %vm276, %v72, 37
    %v307 = vsel %vm277, %v72, 37
    %v308 = vsel %vm278, %v73, 37
    %v309 = vsel %vm279, %v73, 37
    %v310 = vsel %vm280, %v74, 37
    %v311 = vsel %vm281, %v74, 37
    %v312 = vsel %vm282, %v75, 37
    %v313 = vsel %vm283, %v75, 37
    %v314 = vsel %vm284, %v76, 37
    %v315 = vsel %vm285, %v76, 37
    %v316 = vsel %vm286, %v72, 37
    %v317 = vsel %vm287, %v72, 37
    %v318 = vsel %vm288, %v73, 37
    %v319 = vsel %vm289, %v73, 37
    %v320 = vsel %vm290, %v74, 37
    %v321 = vsel %vm291, %v74, 37
    %v322 = vsel %vm292, %v75, 37
    %v323 = vsel %vm293, %v75, 37
    %v324 = vsel %vm294, %v76, 37
    %v325 = vsel %vm295, %v76, 37
    %v326 = vsel %vm296, %v72, 37
    %v327 = vsel %vm297, %v72, 37
    %v328 = vsel %vm298, %v73, 37
    %v329 = vsel %vm299, %v73, 37
    %v330 = vsel %vm300, %v74, 37
    %v331 = vsel %vm301, %v74, 37
    %v332 = vsel %vm302, %v75, 37
    %v333 = vsel %vm303, %v75, 37
    %v334 = vsel %vm304, %v76, 37
    %v335 = vsel %vm305, %v76, 37
    %vm336 = vcmp.lt.s32.totalorder %v306, %v308
    %v337 = vsel %vm336, %v306, %v308
    %vm338 = vcmp.lt.s32.totalorder %v337, %v310
    %v339 = vsel %vm338, %v337, %v310
    %vm340 = vcmp.lt.s32.totalorder %v339, %v312
    %v341 = vsel %vm340, %v339, %v312
    %v342 = vsel %vm140, %v314, 2147483647
    %vm343 = vcmp.lt.s32.totalorder %v341, %v342
    %v344 = vsel %vm343, %v341, %v342
    %v345 = vrot.slane %v344, 4
    %vm346 = vcmp.lt.s32.totalorder %v344, %v345
    %v347 = vsel %vm346, %v344, %v345
    %v348 = vrot.slane %v347, 2
    %vm349 = vcmp.lt.s32.totalorder %v347, %v348
    %v350 = vsel %vm349, %v347, %v348
    %v351 = vrot.slane %v350, 1
    %vm352 = vcmp.lt.s32.totalorder %v350, %v351
    %v353 = vsel %vm352, %v350, %v351
    %vm354 = vcmp.lt.s32.totalorder %v307, %v309
    %v355 = vsel %vm354, %v307, %v309
    %vm356 = vcmp.lt.s32.totalorder %v355, %v311
    %v357 = vsel %vm356, %v355, %v311
    %vm358 = vcmp.lt.s32.totalorder %v357, %v313
    %v359 = vsel %vm358, %v357, %v313
    %v360 = vsel %vm140, %v315, 2147483647
    %vm361 = vcmp.lt.s32.totalorder %v359, %v360
    %v362 = vsel %vm361, %v359, %v360
    %v363 = vrot.slane %v362, 4
    %vm364 = vcmp.lt.s32.totalorder %v362, %v363
    %v365 = vsel %vm364, %v362, %v363
    %v366 = vrot.slane %v365, 2
    %vm367 = vcmp.lt.s32.totalorder %v365, %v366
    %v368 = vsel %vm367, %v365, %v366
    %v369 = vrot.slane %v368, 1
    %vm370 = vcmp.lt.s32.totalorder %v368, %v369
    %v371 = vsel %vm370, %v368, %v369
    %vm372 = vcmp.lt.s32.totalorder %v316, %v318
    %v373 = vsel %vm372, %v316, %v318
    %vm374 = vcmp.lt.s32.totalorder %v373, %v320
    %v375 = vsel %vm374, %v373, %v320
    %vm376 = vcmp.lt.s32.totalorder %v375, %v322
    %v377 = vsel %vm376, %v375, %v322
    %v378 = vsel %vm140, %v324, 2147483647
    %vm379 = vcmp.lt.s32.totalorder %v377, %v378
    %v380 = vsel %vm379, %v377, %v378
    %v381 = vrot.slane %v380, 4
    %vm382 = vcmp.lt.s32.totalorder %v380, %v381
    %v383 = vsel %vm382, %v380, %v381
    %v384 = vrot.slane %v383, 2
    %vm385 = vcmp.lt.s32.totalorder %v383, %v384
    %v386 = vsel %vm385, %v383, %v384
    %v387 = vrot.slane %v386, 1
    %vm388 = vcmp.lt.s32.totalorder %v386, %v387
    %v389 = vsel %vm388, %v386, %v387
    %vm390 = vcmp.lt.s32.totalorder %v317, %v319
    %v391 = vsel %vm390, %v317, %v319
    %vm392 = vcmp.lt.s32.totalorder %v391, %v321
    %v393 = vsel %vm392, %v391, %v321
    %vm394 = vcmp.lt.s32.totalorder %v393, %v323
    %v395 = vsel %vm394, %v393, %v323
    %v396 = vsel %vm140, %v325, 2147483647
    %vm397 = vcmp.lt.s32.totalorder %v395, %v396
    %v398 = vsel %vm397, %v395, %v396
    %v399 = vrot.slane %v398, 4
    %vm400 = vcmp.lt.s32.totalorder %v398, %v399
    %v401 = vsel %vm400, %v398, %v399
    %v402 = vrot.slane %v401, 2
    %vm403 = vcmp.lt.s32.totalorder %v401, %v402
    %v404 = vsel %vm403, %v401, %v402
    %v405 = vrot.slane %v404, 1
    %vm406 = vcmp.lt.s32.totalorder %v404, %v405
    %v407 = vsel %vm406, %v404, %v405
    %vm408 = vcmp.lt.s32.totalorder %v326, %v328
    %v409 = vsel %vm408, %v326, %v328
    %vm410 = vcmp.lt.s32.totalorder %v409, %v330
    %v411 = vsel %vm410, %v409, %v330
    %vm412 = vcmp.lt.s32.totalorder %v411, %v332
    %v413 = vsel %vm412, %v411, %v332
    %v414 = vsel %vm140, %v334, 2147483647
    %vm415 = vcmp.lt.s32.totalorder %v413, %v414
    %v416 = vsel %vm415, %v413, %v414
    %v417 = vrot.slane %v416, 4
    %vm418 = vcmp.lt.s32.totalorder %v416, %v417
    %v419 = vsel %vm418, %v416, %v417
    %v420 = vrot.slane %v419, 2
    %vm421 = vcmp.lt.s32.totalorder %v419, %v420
    %v422 = vsel %vm421, %v419, %v420
    %v423 = vrot.slane %v422, 1
    %vm424 = vcmp.lt.s32.totalorder %v422, %v423
    %v425 = vsel %vm424, %v422, %v423
    %vm426 = vcmp.lt.s32.totalorder %v327, %v329
    %v427 = vsel %vm426, %v327, %v329
    %vm428 = vcmp.lt.s32.totalorder %v427, %v331
    %v429 = vsel %vm428, %v427, %v331
    %vm430 = vcmp.lt.s32.totalorder %v429, %v333
    %v431 = vsel %vm430, %v429, %v333
    %v432 = vsel %vm140, %v335, 2147483647
    %vm433 = vcmp.lt.s32.totalorder %v431, %v432
    %v434 = vsel %vm433, %v431, %v432
    %v435 = vrot.slane %v434, 4
    %vm436 = vcmp.lt.s32.totalorder %v434, %v435
    %v437 = vsel %vm436, %v434, %v435
    %v438 = vrot.slane %v437, 2
    %vm439 = vcmp.lt.s32.totalorder %v437, %v438
    %v440 = vsel %vm439, %v437, %v438
    %v441 = vrot.slane %v440, 1
    %vm442 = vcmp.lt.s32.totalorder %v440, %v441
    %v443 = vsel %vm442, %v440, %v441
    %v444 = vsel %vm77, %v72, 37
    %v445 = vsel %vm78, %v72, 37
    %v446 = vsel %vm79, %v73, 37
    %v447 = vsel %vm80, %v73, 37
    %v448 = vsel %vm81, %v74, 37
    %v449 = vsel %vm82, %v74, 37
    %v450 = vsel %vm83, %v75, 37
    %v451 = vsel %vm84, %v75, 37
    %v452 = vsel %vm85, %v76, 37
    %v453 = vsel %vm86, %v76, 37
    %v454 = vsel %vm87, %v72, 37
    %v455 = vsel %vm88, %v72, 37
    %v456 = vsel %vm89, %v73, 37
    %v457 = vsel %vm90, %v73, 37
    %v458 = vsel %vm91, %v74, 37
    %v459 = vsel %vm92, %v74, 37
    %v460 = vsel %vm93, %v75, 37
    %v461 = vsel %vm94, %v75, 37
    %v462 = vsel %vm95, %v76, 37
    %v463 = vsel %vm96, %v76, 37
    %v464 = vsel %vm97, %v72, 37
    %v465 = vsel %vm98, %v72, 37
    %v466 = vsel %vm99, %v73, 37
    %v467 = vsel %vm100, %v73, 37
    %v468 = vsel %vm101, %v74, 37
    %v469 = vsel %vm102, %v74, 37
    %v470 = vsel %vm103, %v75, 37
    %v471 = vsel %vm104, %v75, 37
    %v472 = vsel %vm105, %v76, 37
    %v473 = vsel %vm106, %v76, 37
    %vm474 = vcmp.lt.s32.totalorder %v444, %v446
    %v475 = vsel %vm474, %v444, %v446
    %vm476 = vcmp.lt.s32.totalorder %v475, %v448
    %v477 = vsel %vm476, %v475, %v448
    %vm478 = vcmp.lt.s32.totalorder %v477, %v450
    %v479 = vsel %vm478, %v477, %v450
    %v480 = vsel %vm140, %v452, 2147483647
    %vm481 = vcmp.lt.s32.totalorder %v479, %v480
    %v482 = vsel %vm481, %v479, %v480
    %v483 = vrot.slane %v482, 4
    %vm484 = vcmp.lt.s32.totalorder %v482, %v483
    %v485 = vsel %vm484, %v482, %v483
    %v486 = vrot.slane %v485, 2
    %vm487 = vcmp.lt.s32.totalorder %v485, %v486
    %v488 = vsel %vm487, %v485, %v486
    %v489 = vrot.slane %v488, 1
    %vm490 = vcmp.lt.s32.totalorder %v488, %v489
    %v491 = vsel %vm490, %v488, %v489
    %vm492 = vcmp.lt.s32.totalorder %v445, %v447
    %v493 = vsel %vm492, %v445, %v447
    %vm494 = vcmp.lt.s32.totalorder %v493, %v449
    %v495 = vsel %vm494, %v493, %v449
    %vm496 = vcmp.lt.s32.totalorder %v495, %v451
    %v497 = vsel %vm496, %v495, %v451
    %v498 = vsel %vm140, %v453, 2147483647
    %vm499 = vcmp.lt.s32.totalorder %v497, %v498
    %v500 = vsel %vm499, %v497, %v498
    %v501 = vrot.slane %v500, 4
    %vm502 = vcmp.lt.s32.totalorder %v500, %v501
    %v503 = vsel %vm502, %v500, %v501
    %v504 = vrot.slane %v503, 2
    %vm505 = vcmp.lt.s32.totalorder %v503, %v504
    %v506 = vsel %vm505, %v503, %v504
    %v507 = vrot.slane %v506, 1
    %vm508 = vcmp.lt.s32.totalorder %v506, %v507
    %v509 = vsel %vm508, %v506, %v507
    %vm510 = vcmp.lt.s32.totalorder %v454, %v456
    %v511 = vsel %vm510, %v454, %v456
    %vm512 = vcmp.lt.s32.totalorder %v511, %v458
    %v513 = vsel %vm512, %v511, %v458
    %vm514 = vcmp.lt.s32.totalorder %v513, %v460
    %v515 = vsel %vm514, %v513, %v460
    %v516 = vsel %vm140, %v462, 2147483647
    %vm517 = vcmp.lt.s32.totalorder %v515, %v516
    %v518 = vsel %vm517, %v515, %v516
    %v519 = vrot.slane %v518, 4
    %vm520 = vcmp.lt.s32.totalorder %v518, %v519
    %v521 = vsel %vm520, %v518, %v519
    %v522 = vrot.slane %v521, 2
    %vm523 = vcmp.lt.s32.totalorder %v521, %v522
    %v524 = vsel %vm523, %v521, %v522
    %v525 = vrot.slane %v524, 1
    %vm526 = vcmp.lt.s32.totalorder %v524, %v525
    %v527 = vsel %vm526, %v524, %v525
    %vm528 = vcmp.lt.s32.totalorder %v455, %v457
    %v529 = vsel %vm528, %v455, %v457
    %vm530 = vcmp.lt.s32.totalorder %v529, %v459
    %v531 = vsel %vm530, %v529, %v459
    %vm532 = vcmp.lt.s32.totalorder %v531, %v461
    %v533 = vsel %vm532, %v531, %v461
    %v534 = vsel %vm140, %v463, 2147483647
    %vm535 = vcmp.lt.s32.totalorder %v533, %v534
    %v536 = vsel %vm535, %v533, %v534
    %v537 = vrot.slane %v536, 4
    %vm538 = vcmp.lt.s32.totalorder %v536, %v537
    %v539 = vsel %vm538, %v536, %v537
    %v540 = vrot.slane %v539, 2
    %vm541 = vcmp.lt.s32.totalorder %v539, %v540
    %v542 = vsel %vm541, %v539, %v540
    %v543 = vrot.slane %v542, 1
    %vm544 = vcmp.lt.s32.totalorder %v542, %v543
    %v545 = vsel %vm544, %v542, %v543
    %vm546 = vcmp.lt.s32.totalorder %v464, %v466
    %v547 = vsel %vm546, %v464, %v466
    %vm548 = vcmp.lt.s32.totalorder %v547, %v468
    %v549 = vsel %vm548, %v547, %v468
    %vm550 = vcmp.lt.s32.totalorder %v549, %v470
    %v551 = vsel %vm550, %v549, %v470
    %v552 = vsel %vm140, %v472, 2147483647
    %vm553 = vcmp.lt.s32.totalorder %v551, %v552
    %v554 = vsel %vm553, %v551, %v552
    %v555 = vrot.slane %v554, 4
    %vm556 = vcmp.lt.s32.totalorder %v554, %v555
    %v557 = vsel %vm556, %v554, %v555
    %v558 = vrot.slane %v557, 2
    %vm559 = vcmp.lt.s32.totalorder %v557, %v558
    %v560 = vsel %vm559, %v557, %v558
    %v561 = vrot.slane %v560, 1
    %vm562 = vcmp.lt.s32.totalorder %v560, %v561
    %v563 = vsel %vm562, %v560, %v561
    %vm564 = vcmp.lt.s32.totalorder %v465, %v467
    %v565 = vsel %vm564, %v465, %v467
    %vm566 = vcmp.lt.s32.totalorder %v565, %v469
    %v567 = vsel %vm566, %v565, %v469
    %vm568 = vcmp.lt.s32.totalorder %v567, %v471
    %v569 = vsel %vm568, %v567, %v471
    %v570 = vsel %vm140, %v473, 2147483647
    %vm571 = vcmp.lt.s32.totalorder %v569, %v570
    %v572 = vsel %vm571, %v569, %v570
    %v573 = vrot.slane %v572, 4
    %vm574 = vcmp.lt.s32.totalorder %v572, %v573
    %v575 = vsel %vm574, %v572, %v573
    %v576 = vrot.slane %v575, 2
    %vm577 = vcmp.lt.s32.totalorder %v575, %v576
    %v578 = vsel %vm577, %v575, %v576
    %v579 = vrot.slane %v578, 1
    %vm580 = vcmp.lt.s32.totalorder %v578, %v579
    %v581 = vsel %vm580, %v578, %v579
    %v582 = vsel %vm204, nan, %v220
    %v583 = vsel %vm205, nan, %v231
    %v584 = vsel %vm206, nan, %v242
    %v585 = vsel %vm207, nan, %v253
    %v586 = vsel %vm208, nan, %v264
    %v587 = vsel %vm209, nan, %v275
    %v588 = vsel %vm204, %v491, %v353
    %v589 = vsel %vm205, %v509, %v371
    %v590 = vsel %vm206, %v527, %v389
    %v591 = vsel %vm207, %v545, %v407
    %v592 = vsel %vm208, %v563, %v425
    %v593 = vsel %vm209, %v581, %v443
    %v594 = vld [vmem:[#allocation5] sm:$0x77]
    %v595 = vld [vmem:[#allocation6] sm:$0x77]
    %597 = vst [vmem:[#allocation1] ss:$2 sm:$0xff] %v594
    %v598 = vld.sshfl [vmem:[#allocation1] sm:$0xff pattern:$0x75316420]
    %v599 = vld.sshfl [vmem:[#allocation1 + $0x8] sm:$0xff pattern:$0x75316420]
    %v600 = vrot.slane %v598, 1
    %v601 = vrot.slane %v599, 1
    %v602 = vrot.slane %v598, 2
    %v603 = vrot.slane %v599, 2
    %vm610 = vcmp.gt.f32.partialorder %v582, %v598
    %vm611 = vcmp.gt.f32.partialorder %v583, %v599
    %vm612 = vcmp.gt.f32.partialorder %v584, %v600
    %vm613 = vcmp.gt.f32.partialorder %v585, %v601
    %vm614 = vcmp.gt.f32.partialorder %v586, %v602
    %vm615 = vcmp.gt.f32.partialorder %v587, %v603
    %vm616 = vcmp.ne.f32.partialorder %v582, %v582
    %vm617 = vcmp.ne.f32.partialorder %v583, %v583
    %vm618 = vcmp.ne.f32.partialorder %v584, %v584
    %vm619 = vcmp.ne.f32.partialorder %v585, %v585
    %vm620 = vcmp.ne.f32.partialorder %v586, %v586
    %vm621 = vcmp.ne.f32.partialorder %v587, %v587
    %vm622 = vcmp.ne.f32.partialorder %v594, %v594
    %vm623 = vmxor %vm622, 1
    %v624 = vsel %vm623, 1, 0
    %625 = vst [vmem:[#allocation1] ss:$2 sm:$0xff] %v624
    %v626 = vld.sshfl [vmem:[#allocation1] sm:$0xff pattern:$0x75316420]
    %v627 = vld.sshfl [vmem:[#allocation1 + $0x8] sm:$0xff pattern:$0x75316420]
    %v628 = vrot.slane %v626, 1
    %v629 = vrot.slane %v627, 1
    %v630 = vrot.slane %v626, 2
    %v631 = vrot.slane %v627, 2
    %vm632 = vcmp.ne.s32.totalorder %v626, 0
    %vm633 = vcmp.ne.s32.totalorder %v627, 0
    %vm634 = vcmp.ne.s32.totalorder %v628, 0
    %vm635 = vcmp.ne.s32.totalorder %v629, 0
    %vm636 = vcmp.ne.s32.totalorder %v630, 0
    %vm637 = vcmp.ne.s32.totalorder %v631, 0
    %vm638 = vmand %vm616, %vm632
    %vm639 = vmand %vm617, %vm633
    %vm640 = vmand %vm618, %vm634
    %vm641 = vmand %vm619, %vm635
    %vm642 = vmand %vm620, %vm636
    %vm643 = vmand %vm621, %vm637
    %vm644 = vmor %vm610, %vm638
    %vm645 = vmor %vm611, %vm639
    %vm646 = vmor %vm612, %vm640
    %vm647 = vmor %vm613, %vm641
    %vm648 = vmor %vm614, %vm642
    %vm649 = vmor %vm615, %vm643
    %650 = vst [vmem:[#allocation1] ss:$2 sm:$0xff] %v594
    %v651 = vld.sshfl [vmem:[#allocation1] sm:$0xff pattern:$0x75316420]
    %v652 = vld.sshfl [vmem:[#allocation1 + $0x8] sm:$0xff pattern:$0x75316420]
    %v653 = vrot.slane %v651, 1
    %v654 = vrot.slane %v652, 1
    %v655 = vrot.slane %v651, 2
    %v656 = vrot.slane %v652, 2
    %v663 = vsel %vm644, %v582, %v651
    %v664 = vsel %vm645, %v583, %v652
    %v665 = vsel %vm646, %v584, %v653
    %v666 = vsel %vm647, %v585, %v654
    %v667 = vsel %vm648, %v586, %v655
    %v668 = vsel %vm649, %v587, %v656
    %v675 = vrot.slane %v664, 4
    %v676 = vrot.slane %v666, 4
    %v677 = vrot.slane %v668, 4
    %vm678 = vcmask 1043456
    %v679 = vsel %vm678, %v663, %v675
    %v680 = vsel %vm678, %v665, %v676
    %v681 = vsel %vm678, %v667, %v677
    %v682 = vrot.slane %v680, 7
    %vm683 = vcmask 1041409
    %v684 = vsel %vm683, %v682, %v679
    %vm685 = vcmask 1045509
    %v686 = vsel %vm685, %v682, %v684
    %v687 = vrot.slane %v681, 6
    %vm688 = vcmask 1042434
    %v689 = vsel %vm688, %v687, %v686
    %vm690 = vcmask 1046534
    %v691 = vsel %vm690, %v687, %v689
    %693 = vst [vmem:[#allocation5] sm:$0x77] %v691
    %694 = vst [vmem:[#allocation1] ss:$2 sm:$0xff] %v595
    %v695 = vld.sshfl [vmem:[#allocation1] sm:$0xff pattern:$0x75316420]
    %v696 = vld.sshfl [vmem:[#allocation1 + $0x8] sm:$0xff pattern:$0x75316420]
    %v697 = vrot.slane %v695, 1
    %v698 = vrot.slane %v696, 1
    %v699 = vrot.slane %v695, 2
    %v700 = vrot.slane %v696, 2
    %v701 = vsel %vm644, %v588, %v695
    %v702 = vsel %vm645, %v589, %v696
    %v703 = vsel %vm646, %v590, %v697
    %v704 = vsel %vm647, %v591, %v698
    %v705 = vsel %vm648, %v592, %v699
    %v706 = vsel %vm649, %v593, %v700
    %v707 = vrot.slane %v702, 4
    %v708 = vrot.slane %v704, 4
    %v709 = vrot.slane %v706, 4
    %v710 = vsel %vm678, %v701, %v707
    %v711 = vsel %vm678, %v703, %v708
    %v712 = vsel %vm678, %v705, %v709
    %v713 = vrot.slane %v711, 7
    %v714 = vsel %vm683, %v713, %v710
    %v715 = vsel %vm685, %v713, %v714
    %v716 = vrot.slane %v712, 6
    %v717 = vsel %vm688, %v716, %v715
    %v718 = vsel %vm690, %v716, %v717
    %719 = vst [vmem:[#allocation6] sm:$0x77] %v718
    // Predicated region
    $region14: #{tpu_custom_call.1} parent=1 // pred_check
      _
    $region15: #{tpu_custom_call.1} parent=1 // pred_check_branch
      %721 = sbr.rel (0) target = $region17
    $region16: #{tpu_custom_call.1} parent=1 // pred_region
      %723 = vsyncadd [#allocation4], 0
      %s725 = sshll.u32 [#allocation5], 4
      %s726 = int_to_ptr.vmem [resolvable:$true] %s725
      %s727 = sshll.u32 %s1, 4
      %s728 = int_to_ptr.hbm [resolvable:$true] %s727
      %730 = dma.vmem_to_hbm [thread:$0]  %s726, 128, %s728, [#allocation4]
    $region17: #{tpu_custom_call.1} parent=1 // pred_fallthru
      _
    // Predicated region
    $region18: #{tpu_custom_call.1} parent=1 // pred_check
      _
    $region19: #{tpu_custom_call.1} parent=1 // pred_check_branch
      %732 = sbr.rel (0) target = $region21
    $region20: #{tpu_custom_call.1} parent=1 // pred_region
      %734 = vsyncadd [#allocation7], 0
      %s736 = sshll.u32 [#allocation6], 4
      %s737 = int_to_ptr.vmem [resolvable:$true] %s736
      %s738 = sshll.u32 %s2, 4
      %s739 = int_to_ptr.hbm [resolvable:$true] %s738
      %741 = dma.vmem_to_hbm [thread:$0]  %s737, 128, %s739, [#allocation7]
    $region21: #{tpu_custom_call.1} parent=1 // pred_fallthru
      _
    // Predicated region
    $region22: #{tpu_custom_call.1} parent=1 // pred_check
      _
    $region23: #{tpu_custom_call.1} parent=1 // pred_check_branch
      %743 = sbr.rel (0) target = $region25
    $region24: #{tpu_custom_call.1} parent=1 // pred_region
      %745 = dma.done [#allocation4], 128
    $region25: #{tpu_custom_call.1} parent=1 // pred_fallthru
      _
    // Predicated region
    $region26: #{tpu_custom_call.1} parent=1 // pred_check
      _
    $region27: #{tpu_custom_call.1} parent=1 // pred_check_branch
      %747 = sbr.rel (0) target = $region29
    $region28: #{tpu_custom_call.1} parent=1 // pred_region
      %749 = dma.done [#allocation7], 128
    $region29: #{tpu_custom_call.1} parent=1 // pred_fallthru
      _
    %750 = vsyncpa [#allocation3], 1
    %751 = vsyncpa [#allocation4], 1
    %752 = vsyncpa [#allocation7], 1

</llo_original>
